<compile_context>
chip_gen: v7x
topology: tpu7x:2x2x1
jax: 0.10.0
libtpu: 0.0.40
codegen_flags: <defaults>
</compile_context>

<pallas_src>
import numpy as np
import jax
import jax.numpy as jnp
from jax import lax
from jax.experimental import pallas as pl
from jax.experimental.pallas import tpu as pltpu


def _round_up(a: int, m: int) -> int:
    return ((a + m - 1) // m) * m


def _inputxgrad_kernel(x_ref, w1_ref, b1_ref, w2t_ref, attr_ref, acc_ref, dh_ref):
    """Two-phase grid (batch_tile, phase, d_tile).

    Phase 0 (reduction over D tiles): acc += x_tile @ W1_tile; on the last D
    tile compute dh = (1 - tanh(acc+b1)^2) * W2[:, t] into VMEM scratch.
    Phase 1 (second D pass): g_tile = dh @ W1_tile^T (contract H on the MXU,
    no transposed copy of W1 needed); attr_tile = x_tile * g_tile.
    """
    p = pl.program_id(1)
    d = pl.program_id(2)
    last_d = pl.num_programs(2) - 1

    @pl.when((p == 0) & (d == 0))
    def _():
        acc_ref[...] = jnp.zeros_like(acc_ref)

    @pl.when(p == 0)
    def _():
        acc_ref[...] += jnp.dot(x_ref[...], w1_ref[...],
                                preferred_element_type=jnp.float32)
        # This output block is revisited (and fully overwritten) in phase 1;
        # write zeros so the intermediate writeback is deterministic.
        attr_ref[...] = jnp.zeros_like(attr_ref)

    @pl.when((p == 0) & (d == last_d))
    def _():
        h = jnp.tanh(acc_ref[...] + b1_ref[...])
        dh_ref[...] = (1.0 - h * h) * w2t_ref[...]

    @pl.when(p == 1)
    def _():
        # g = dh @ W1^T, expressed as a contraction over the hidden axis of the
        # untransposed W1 tile (dims: dh (TB, Hp) x W1 (TD, Hp) -> (TB, TD)).
        g = lax.dot_general(
            dh_ref[...], w1_ref[...],
            dimension_numbers=(((1,), (1,)), ((), ())),
            preferred_element_type=jnp.float32)
        attr_ref[...] = x_ref[...] * g


def attributer_inputxgradient(x_tuple, params, target=1):
    """JAX/Pallas equivalent of Attributer.forward with attr_methods='InputXGradient'.

    x_tuple: tuple of NCHW float32 arrays (wavelet coefficient tensors), all with
             the same per-sample flattened size D (shared synthetic model `mt`).
    params : dict with W1 (D, H), b1 (H,), W2 (H, num_classes), b2 (unused by the
             attribution — it drops out of the gradient).
    Returns a tuple of attributions, one per input tensor, same shapes as inputs.
    """
    W1 = params["W1"].astype(jnp.float32)
    b1 = params["b1"].astype(jnp.float32)
    W2 = params["W2"].astype(jnp.float32)
    D, H = W1.shape

    # ---- flatten and stack every tuple element along the batch axis ----------
    flats, metas = [], []
    for x in x_tuple:
        B = x.shape[0]
        d_i = int(np.prod(x.shape[1:]))
        assert d_i == D, "all wavelet tensors must share the model input size D"
        flats.append(x.reshape(B, D).astype(jnp.float32))
        metas.append((x.shape, B))
    x_all = jnp.concatenate(flats, axis=0)
    b_total = x_all.shape[0]

    # ---- tile sizes & padding -------------------------------------------------
    LANE = 128
    TB = 8                                   # sublane-aligned batch tile
    TD = 512 if D >= 512 else _round_up(D, LANE)
    B_pad = _round_up(max(b_total, TB), TB)
    D_pad = _round_up(D, TD)
    H_pad = _round_up(H, LANE)

    x_pad = jnp.pad(x_all, ((0, B_pad - b_total), (0, D_pad - D)))
    w1_pad = jnp.pad(W1, ((0, D_pad - D), (0, H_pad - H)))
    b1_pad = jnp.pad(b1, (0, H_pad - H)).reshape(1, H_pad)
    w2t_pad = jnp.pad(W2[:, target], (0, H_pad - H)).reshape(1, H_pad)

    nb = B_pad // TB
    nd = D_pad // TD
    grid = (nb, 2, nd)                       # (batch, phase, D-reduction)

    cost = pl.CostEstimate(
        flops=4 * B_pad * D_pad * H_pad,                     # two matmuls
        transcendentals=B_pad * H_pad,                       # tanh
        bytes_accessed=(2 * B_pad * D_pad                    # x read twice
                        + 2 * D_pad * H_pad                  # W1 read twice
                        + B_pad * D_pad) * 4)                # attr write

    attr_pad = pl.pallas_call(
        _inputxgrad_kernel,
        out_shape=jax.ShapeDtypeStruct((B_pad, D_pad), jnp.float32),
        grid_spec=pltpu.PrefetchScalarGridSpec(
            num_scalar_prefetch=0,
            grid=grid,
            in_specs=[
                pl.BlockSpec((TB, TD), lambda i, p, d: (i, d)),       # x
                pl.BlockSpec((TD, H_pad), lambda i, p, d: (d, 0)),    # W1 (only d)
                pl.BlockSpec((1, H_pad), lambda i, p, d: (0, 0)),     # b1
                pl.BlockSpec((1, H_pad), lambda i, p, d: (0, 0)),     # W2[:, t]
            ],
            out_specs=pl.BlockSpec((TB, TD), lambda i, p, d: (i, d)),
            scratch_shapes=[
                pltpu.VMEM((TB, H_pad), jnp.float32),   # pre-activation accumulator
                pltpu.VMEM((TB, H_pad), jnp.float32),   # dh
            ]),
        compiler_params=pltpu.CompilerParams(
            dimension_semantics=("parallel", "arbitrary", "arbitrary"),
            vmem_limit_bytes=32 * 1024 * 1024),
        cost_estimate=cost,
    )(x_pad, w1_pad, b1_pad, w2t_pad)

    # ---- un-pad and split back into the original tuple structure -------------
    outs, off = [], 0
    for shape, B in metas:
        outs.append(attr_pad[off:off + B, :D].reshape(shape))
        off += B
    return tuple(outs)


def _reference_inputxgradient(x_tuple, params, target=1):
    """Pure-JAX reference using autodiff (mirrors the torch.autograd.grad path)."""
    W1, b1, W2, b2 = params["W1"], params["b1"], params["W2"], params["b2"]

    def mt(x_flat):
        h = jnp.tanh(x_flat @ W1 + b1)
        return h @ W2 + b2

    outs = []
    for x in x_tuple:
        B = x.shape[0]
        D = int(np.prod(x.shape[1:]))
        x_flat = x.reshape(B, D).astype(jnp.float32)

        def scalar_out(xf):
            return jnp.sum(mt(xf)[:, target])   # sum over unbound batch outputs

        g = jax.grad(scalar_out)(x_flat)
        outs.append((x_flat * g).reshape(x.shape))
    return tuple(outs)


if __name__ == "__main__":
    # Small shapes consistent with the module: x is a tuple of NCHW wavelet coeffs.
    B, C, Himg, Wimg = 2, 4, 16, 16
    D = C * Himg * Wimg                 # 1024
    HID = 32
    NUM_CLASSES = 10

    key = jax.random.PRNGKey(0)
    k_x1, k_x2, k_w1, k_b1, k_w2, k_b2 = jax.random.split(key, 6)

    x1 = jax.random.normal(k_x1, (B, C, Himg, Wimg), dtype=jnp.float32)
    x2 = jax.random.normal(k_x2, (B, C, Himg, Wimg), dtype=jnp.float32)
    params = {
        "W1": jax.random.normal(k_w1, (D, HID), dtype=jnp.float32) * 0.05,
        "b1": jax.random.normal(k_b1, (HID,), dtype=jnp.float32) * 0.05,
        "W2": jax.random.normal(k_w2, (HID, NUM_CLASSES), dtype=jnp.float32) * 0.05,
        "b2": jax.random.normal(k_b2, (NUM_CLASSES,), dtype=jnp.float32) * 0.05,
    }

    attrs = attributer_inputxgradient((x1, x2), params, target=1)
    attrs = jax.block_until_ready(attrs)

    ref = _reference_inputxgradient((x1, x2), params, target=1)
    ref = jax.block_until_ready(ref)

    for a, r in zip(attrs, ref):
        np.testing.assert_allclose(np.asarray(a), np.asarray(r),
                                   rtol=1e-4, atol=1e-5)

    # TODO(synk): IntegratedGradient / Saliency branches and the target=-1 loop
    # are thin wrappers over the same forward/backward pipeline (different
    # post-processing / extra batch axis) and are not separately kernelized.
    print("KERNEL_OK")
</pallas_src>

<mosaic_0001>
module attributes {stable_mosaic.version = 11 : i64} {
  func.func @_inputxgrad_kernel(%arg0: i32, %arg1: i32, %arg2: i32, %arg3: memref<8x512xf32, #tpu.memory_space<vmem>>, %arg4: memref<512x128xf32, #tpu.memory_space<vmem>>, %arg5: memref<1x128xf32, #tpu.memory_space<vmem>>, %arg6: memref<1x128xf32, #tpu.memory_space<vmem>>, %arg7: memref<8x512xf32, #tpu.memory_space<vmem>>, %arg8: memref<8x128xf32, #tpu.memory_space<vmem>>, %arg9: memref<8x128xf32, #tpu.memory_space<vmem>>) attributes {dimension_semantics = [#tpu.dimension_semantics<parallel>, #tpu.dimension_semantics<arbitrary>, #tpu.dimension_semantics<arbitrary>], iteration_bounds = array<i64: 1, 2, 2>, scalar_prefetch = 0 : i64, scratch_operands = 2 : i64, tpu.core_type = #tpu.core_type<tc>, window_params = [{transform_indices = @transform_0, window_bounds = array<i64: 8, 512>}, {transform_indices = @transform_1, window_bounds = array<i64: 512, 128>}, {pipeline_mode = #tpu.pipeline_mode<synchronous>, transform_indices = @transform_2, window_bounds = array<i64: 1, 128>}, {pipeline_mode = #tpu.pipeline_mode<synchronous>, transform_indices = @transform_3, window_bounds = array<i64: 1, 128>}, {transform_indices = @transform_4, window_bounds = array<i64: 8, 512>}]} {
    %c0_i32 = arith.constant 0 : i32
    %0 = arith.cmpi eq, %arg1, %c0_i32 : i32
    %c0_i32_0 = arith.constant 0 : i32
    %1 = arith.cmpi eq, %arg2, %c0_i32_0 : i32
    %2 = arith.andi %0, %1 : i1
    %3 = arith.extui %2 : i1 to i32
    %c0_i32_1 = arith.constant 0 : i32
    %4 = arith.cmpi ne, %3, %c0_i32_1 : i32
    scf.if %4 {
      %cst = arith.constant 0.000000e+00 : f32
      %16 = vector.broadcast %cst : f32 to vector<8x128xf32>
      %c0 = arith.constant 0 : index
      %c0_8 = arith.constant 0 : index
      %17 = vector.load %arg8[%c0, %c0_8] : memref<8x128xf32, #tpu.memory_space<vmem>>, vector<8x128xf32>
      tpu.vector_store %arg8[%c0, %c0_8], %16 {strides = array<i32>} : memref<8x128xf32, #tpu.memory_space<vmem>>, vector<8x128xf32>,
    } else {
    }
    %c0_i32_2 = arith.constant 0 : i32
    %5 = arith.cmpi eq, %arg1, %c0_i32_2 : i32
    %6 = arith.extui %5 : i1 to i32
    %c0_i32_3 = arith.constant 0 : i32
    %7 = arith.cmpi ne, %6, %c0_i32_3 : i32
    scf.if %7 {
      %c0 = arith.constant 0 : index
      %c0_8 = arith.constant 0 : index
      %16 = vector.load %arg8[%c0, %c0_8] : memref<8x128xf32, #tpu.memory_space<vmem>>, vector<8x128xf32>
      %c0_9 = arith.constant 0 : index
      %c0_10 = arith.constant 0 : index
      %17 = vector.load %arg3[%c0_9, %c0_10] : memref<8x512xf32, #tpu.memory_space<vmem>>, vector<8x512xf32>
      %c0_11 = arith.constant 0 : index
      %c0_12 = arith.constant 0 : index
      %18 = vector.load %arg4[%c0_11, %c0_12] : memref<512x128xf32, #tpu.memory_space<vmem>>, vector<512x128xf32>
      %cst = arith.constant dense<0.000000e+00> : vector<8x128xf32>
      %19 = tpu.matmul %17, %18, %cst {dimension_numbers = #tpu.dot_dimension_numbers<[1], [0], [0], [1], [0, 0, 1, 1], [], []>} : vector<8x512xf32>, vector<512x128xf32>, vector<8x128xf32> -> vector<8x128xf32>
      %20 = arith.addf %16, %19 : vector<8x128xf32>
      %c0_13 = arith.constant 0 : index
      %c0_14 = arith.constant 0 : index
      %21 = vector.load %arg8[%c0_13, %c0_14] : memref<8x128xf32, #tpu.memory_space<vmem>>, vector<8x128xf32>
      tpu.vector_store %arg8[%c0_13, %c0_14], %20 {strides = array<i32>} : memref<8x128xf32, #tpu.memory_space<vmem>>, vector<8x128xf32>,
      %cst_15 = arith.constant 0.000000e+00 : f32
      %22 = vector.broadcast %cst_15 : f32 to vector<8x512xf32>
      %c0_16 = arith.constant 0 : index
      %c0_17 = arith.constant 0 : index
      %23 = vector.load %arg7[%c0_16, %c0_17] : memref<8x512xf32, #tpu.memory_space<vmem>>, vector<8x512xf32>
      tpu.vector_store %arg7[%c0_16, %c0_17], %22 {strides = array<i32>} : memref<8x512xf32, #tpu.memory_space<vmem>>, vector<8x512xf32>,
    } else {
    }
    %c0_i32_4 = arith.constant 0 : i32
    %8 = arith.cmpi eq, %arg1, %c0_i32_4 : i32
    %c1_i32 = arith.constant 1 : i32
    %9 = arith.cmpi eq, %arg2, %c1_i32 : i32
    %10 = arith.andi %8, %9 : i1
    %11 = arith.extui %10 : i1 to i32
    %c0_i32_5 = arith.constant 0 : i32
    %12 = arith.cmpi ne, %11, %c0_i32_5 : i32
    scf.if %12 {
      %c0 = arith.constant 0 : index
      %c0_8 = arith.constant 0 : index
      %16 = vector.load %arg8[%c0, %c0_8] : memref<8x128xf32, #tpu.memory_space<vmem>>, vector<8x128xf32>
      %c0_9 = arith.constant 0 : index
      %c0_10 = arith.constant 0 : index
      %17 = vector.load %arg5[%c0_9, %c0_10] : memref<1x128xf32, #tpu.memory_space<vmem>>, vector<1x128xf32>
      %18 = vector.broadcast %17 : vector<1x128xf32> to vector<8x128xf32>
      %19 = arith.addf %16, %18 : vector<8x128xf32>
      %20 = math.tanh %19 : vector<8x128xf32>
      %21 = arith.mulf %20, %20 : vector<8x128xf32>
      %cst = arith.constant 1.000000e+00 : f32
      %22 = vector.broadcast %cst : f32 to vector<8x128xf32>
      %23 = arith.subf %22, %21 : vector<8x128xf32>
      %c0_11 = arith.constant 0 : index
      %c0_12 = arith.constant 0 : index
      %24 = vector.load %arg6[%c0_11, %c0_12] : memref<1x128xf32, #tpu.memory_space<vmem>>, vector<1x128xf32>
      %25 = vector.broadcast %24 : vector<1x128xf32> to vector<8x128xf32>
      %26 = arith.mulf %23, %25 : vector<8x128xf32>
      %c0_13 = arith.constant 0 : index
      %c0_14 = arith.constant 0 : index
      %27 = vector.load %arg9[%c0_13, %c0_14] : memref<8x128xf32, #tpu.memory_space<vmem>>, vector<8x128xf32>
      tpu.vector_store %arg9[%c0_13, %c0_14], %26 {strides = array<i32>} : memref<8x128xf32, #tpu.memory_space<vmem>>, vector<8x128xf32>,
    } else {
    }
    %c1_i32_6 = arith.constant 1 : i32
    %13 = arith.cmpi eq, %arg1, %c1_i32_6 : i32
    %14 = arith.extui %13 : i1 to i32
    %c0_i32_7 = arith.constant 0 : i32
    %15 = arith.cmpi ne, %14, %c0_i32_7 : i32
    scf.if %15 {
      %c0 = arith.constant 0 : index
      %c0_8 = arith.constant 0 : index
      %16 = vector.load %arg9[%c0, %c0_8] : memref<8x128xf32, #tpu.memory_space<vmem>>, vector<8x128xf32>
      %c0_9 = arith.constant 0 : index
      %c0_10 = arith.constant 0 : index
      %17 = vector.load %arg4[%c0_9, %c0_10] : memref<512x128xf32, #tpu.memory_space<vmem>>, vector<512x128xf32>
      %cst = arith.constant dense<0.000000e+00> : vector<8x512xf32>
      %18 = tpu.matmul %16, %17, %cst {dimension_numbers = #tpu.dot_dimension_numbers<[1], [1], [0], [0], [0, 0, 1, 0], [], []>} : vector<8x128xf32>, vector<512x128xf32>, vector<8x512xf32> -> vector<8x512xf32>
      %c0_11 = arith.constant 0 : index
      %c0_12 = arith.constant 0 : index
      %19 = vector.load %arg3[%c0_11, %c0_12] : memref<8x512xf32, #tpu.memory_space<vmem>>, vector<8x512xf32>
      %20 = arith.mulf %19, %18 : vector<8x512xf32>
      %c0_13 = arith.constant 0 : index
      %c0_14 = arith.constant 0 : index
      %21 = vector.load %arg7[%c0_13, %c0_14] : memref<8x512xf32, #tpu.memory_space<vmem>>, vector<8x512xf32>
      tpu.vector_store %arg7[%c0_13, %c0_14], %20 {strides = array<i32>} : memref<8x512xf32, #tpu.memory_space<vmem>>, vector<8x512xf32>,
    } else {
    }
    return
  }
  func.func @transform_0(%arg0: i32, %arg1: i32, %arg2: i32) -> (i32, i32) {
    %c0_i32 = arith.constant 0 : i32
    return %arg0, %arg2 : i32, i32
  }
  func.func @transform_1(%arg0: i32, %arg1: i32, %arg2: i32) -> (i32, i32) {
    %c0_i32 = arith.constant 0 : i32
    %c0_i32_0 = arith.constant 0 : i32
    return %arg2, %c0_i32 : i32, i32
  }
  func.func @transform_2(%arg0: i32, %arg1: i32, %arg2: i32) -> (i32, i32) {
    %c0_i32 = arith.constant 0 : i32
    %c0_i32_0 = arith.constant 0 : i32
    %c0_i32_1 = arith.constant 0 : i32
    return %c0_i32, %c0_i32_0 : i32, i32
  }
  func.func @transform_3(%arg0: i32, %arg1: i32, %arg2: i32) -> (i32, i32) {
    %c0_i32 = arith.constant 0 : i32
    %c0_i32_0 = arith.constant 0 : i32
    %c0_i32_1 = arith.constant 0 : i32
    return %c0_i32, %c0_i32_0 : i32, i32
  }
  func.func @transform_4(%arg0: i32, %arg1: i32, %arg2: i32) -> (i32, i32) {
    %c0_i32 = arith.constant 0 : i32
    return %arg0, %arg2 : i32, i32
  }
}

</mosaic_0001>

<llo_original>
// kernel: tpu_custom_call.1
$region0: #{tpu_custom_call.1}
  #allocation0 [shape = 'u32[]', space=smem, size = 0x4, offset = 0x4, fixed_abs, tag = 'smem constant byte address 0x4 - core index']
  #allocation1 [shape = 'u32[144,128]{1,0:T(1,128)}', space=vmem, size = 0x12000, scoped, tag = 'internal scratch']
  #allocation2 [shape = 'f32[8,128]{1,0:T(8,128)}', space=vmem, size = 0x1000, scoped, tag = 'scratch operand']
  #allocation3 [shape = 'f32[8,128]{1,0:T(8,128)}', space=vmem, size = 0x1000, scoped, tag = 'scratch operand']
  %s0 = inlined_call_operand.hbm [shape: f32[8,1024], index: 0, kind: input, shape index: {}]
  %s1 = inlined_call_operand.hbm [shape: f32[1024,128], index: 1, kind: input, shape index: {}]
  %s2 = inlined_call_operand.vmem [shape: f32[1,128], index: 2, kind: input, shape index: {}]
  %s3 = inlined_call_operand.vmem [shape: f32[1,128], index: 3, kind: input, shape index: {}]
  %s4 = inlined_call_operand.hbm [shape: f32[8,1024], index: 4, kind: output, shape index: {}]
  %s5 = sld [smem:[#allocation0]]
  $region73: #{tpu_custom_call.1} parent=0
    _
  %s7 = ssub.s32 1, %s5
  %s8 = scalar_select 0, %s7, %s5
  $region1: #{tpu_custom_call.1} parent=0
    #allocation4 [shape = 'u8[32768]{0}', space=vmem, size = 0x8000, scoped, tag = 'input window, operand 0']
    #allocation5 [shape = 's32[2]{0}', space=sflag, size = 0x8, scoped, tag = 'scoped memory for tpu_custom_call.1']
    #allocation6 [shape = 's32[2]{0}', space=sflag, size = 0x8, scoped, tag = 'scoped memory for tpu_custom_call.1']
    #allocation7 [shape = 'u8[524288]{0}', space=vmem, size = 0x80000, scoped, tag = 'input window, operand 1']
    #allocation8 [shape = 's32[2]{0}', space=sflag, size = 0x8, scoped, tag = 'scoped memory for tpu_custom_call.1']
    #allocation9 [shape = 'u8[32768]{0}', space=vmem, size = 0x8000, scoped, tag = 'output window, operand 0']
    %9 = vsyncpa [#allocation5], 0
    %s10 = scalar_lea.sflag [#allocation5], 1
    %11 = vsyncpa %s10, 0
    %12 = vsyncpa [#allocation8], 0
    %s13 = scalar_lea.sflag [#allocation8], 1
    %14 = vsyncpa %s13, 0
    %15 = vsyncpa [#allocation6], 0
    %s16 = scalar_lea.sflag [#allocation6], 1
    %17 = vsyncpa %s16, 0
    loop: start=0, step=1, limit=6
    $region2: #{tpu_custom_call.1} parent=1 // loop_pre_header
      _
    $region3: #{tpu_custom_call.1} parent=1 // loop_header
      %s19 = sphi 0, %s23
      %p20 = scmp.ge.s32.totalorder %s19, 6
      %s26 = sphi 0, %s45
      %s27 = sphi 0, %s41
      %s28 = sphi 0, %s37
      %s29 = sphi 0, %s26
      %s30 = sphi 0, %s27
      %s31 = sphi 0, %s28
      %s32 = sphi 0, %s29
      %s33 = sphi 0, %s30
      %s34 = sphi 0, %s31
      %s50 = sphi 0, %s52
      %s53 = sphi 0, %s50
      %s54 = sphi 0, %s53
      %s70 = sphi 0, %s54
      %s76 = sphi 0, %s78
      %s79 = sphi 0, %s76
      %s80 = sphi 0, %s79
      %s96 = sphi 0, %s80
      %s100 = sphi 0, %s100
      %s102 = sphi 0, %s100
      %s103 = sphi 0, %s102
      %s117 = sphi 0, %s103
      %s121 = sphi 0, %s121
      %s123 = sphi 0, %s121
      %s124 = sphi 0, %s123
      %s138 = sphi 0, %s124
      %s146 = sphi 0, %s148
      %s149 = sphi 0, %s146
      %s150 = sphi 0, %s149
      %s166 = sphi 0, %s150
    $region4: #{tpu_custom_call.1} parent=1 // loop_header_branch
      %22 = sbr.rel (%p20) target = $region8
    $region5: #{tpu_custom_call.1} parent=1 // loop_body
      %s24 = ssub.s32 %s19, 1
      %s25 = ssub.s32 %s19, 2
      %s35 = sadd.s32 1, %s28
      %p36 = scmp.ge.s32.totalorder %s35, 2
      %s37 = scalar_select %p36, 0, %s35
      %s38 = sadd.s32 1, %s27
      %s39 = scalar_select %p36, %s38, %s27
      %p40 = scmp.ge.s32.totalorder %s39, 2
      %s41 = scalar_select %p40, 0, %s39
      %s42 = sadd.s32 1, %s26
      %s43 = scalar_select %p40, %s42, %s26
      %p44 = scmp.ge.s32.totalorder %s43, 1
      %s45 = scalar_select %p44, 0, %s43
      %s46 = ssub.s32 %s26, %s45
      %s47 = ssub.s32 %s28, %s37
      %s48 = sor.u32 %s46, %s47
      %p49 = scmp.eq.s32.totalorder %s48, 0
      %s51 = sadd.s32 %s50, 1
      %s52 = scalar_select %p49, %s50, %s51
      %p55 = pneg %p49
      %p56 = scmp.eq.s32.totalorder %s19, 3
      %p57 = por %p55, %p56
      %p58 = scmp.ne.s32.totalorder %s50, %s53
      %p59 = scmp.eq.s32.totalorder %s19, 0
      %p60 = por %p58, %p59
      %p61 = scmp.ne.s32.totalorder %s50, %s53
      %p62 = scmp.eq.s32.totalorder %s24, 3
      %p63 = por %p61, %p62
      %p64 = scmp.ne.s32.totalorder %s53, %s54
      %p65 = scmp.eq.s32.totalorder %s24, 0
      %p66 = por %p64, %p65
      %p67 = scmp.ne.s32.totalorder %s53, %s54
      %p68 = scmp.eq.s32.totalorder %s25, 3
      %p69 = por %p67, %p68
      %p71 = scmp.ne.s32.totalorder %s54, %s70
      %p72 = scmp.eq.s32.totalorder %s25, 0
      %p73 = por %p71, %p72
      %s74 = ssub.s32 %s28, %s37
      %p75 = scmp.eq.s32.totalorder %s74, 0
      %s77 = sadd.s32 %s76, 1
      %s78 = scalar_select %p75, %s76, %s77
      %p81 = pneg %p75
      %p82 = scmp.eq.s32.totalorder %s19, 3
      %p83 = por %p81, %p82
      %p84 = scmp.ne.s32.totalorder %s76, %s79
      %p85 = scmp.eq.s32.totalorder %s19, 0
      %p86 = por %p84, %p85
      %p87 = scmp.ne.s32.totalorder %s76, %s79
      %p88 = scmp.eq.s32.totalorder %s24, 3
      %p89 = por %p87, %p88
      %p90 = scmp.ne.s32.totalorder %s79, %s80
      %p91 = scmp.eq.s32.totalorder %s24, 0
      %p92 = por %p90, %p91
      %p93 = scmp.ne.s32.totalorder %s79, %s80
      %p94 = scmp.eq.s32.totalorder %s25, 3
      %p95 = por %p93, %p94
      %p97 = scmp.ne.s32.totalorder %s80, %s96
      %p98 = scmp.eq.s32.totalorder %s25, 0
      %p99 = por %p97, %p98
      %s101 = sadd.s32 %s100, 1
      %p104 = scmp.eq.s32.totalorder %s19, 3
      %p105 = scmp.ne.s32.totalorder %s100, %s102
      %p106 = scmp.eq.s32.totalorder %s19, 0
      %p107 = por %p105, %p106
      %p108 = scmp.ne.s32.totalorder %s100, %s102
      %p109 = scmp.eq.s32.totalorder %s24, 3
      %p110 = por %p108, %p109
      %p111 = scmp.ne.s32.totalorder %s102, %s103
      %p112 = scmp.eq.s32.totalorder %s24, 0
      %p113 = por %p111, %p112
      %p114 = scmp.ne.s32.totalorder %s102, %s103
      %p115 = scmp.eq.s32.totalorder %s25, 3
      %p116 = por %p114, %p115
      %p118 = scmp.ne.s32.totalorder %s103, %s117
      %p119 = scmp.eq.s32.totalorder %s25, 0
      %p120 = por %p118, %p119
      %s122 = sadd.s32 %s121, 1
      %p125 = scmp.eq.s32.totalorder %s19, 3
      %p126 = scmp.ne.s32.totalorder %s121, %s123
      %p127 = scmp.eq.s32.totalorder %s19, 0
      %p128 = por %p126, %p127
      %p129 = scmp.ne.s32.totalorder %s121, %s123
      %p130 = scmp.eq.s32.totalorder %s24, 3
      %p131 = por %p129, %p130
      %p132 = scmp.ne.s32.totalorder %s123, %s124
      %p133 = scmp.eq.s32.totalorder %s24, 0
      %p134 = por %p132, %p133
      %p135 = scmp.ne.s32.totalorder %s123, %s124
      %p136 = scmp.eq.s32.totalorder %s25, 3
      %p137 = por %p135, %p136
      %p139 = scmp.ne.s32.totalorder %s124, %s138
      %p140 = scmp.eq.s32.totalorder %s25, 0
      %p141 = por %p139, %p140
      %s142 = ssub.s32 %s26, %s45
      %s143 = ssub.s32 %s28, %s37
      %s144 = sor.u32 %s142, %s143
      %p145 = scmp.eq.s32.totalorder %s144, 0
      %s147 = sadd.s32 %s146, 1
      %s148 = scalar_select %p145, %s146, %s147
      %p151 = pneg %p145
      %p152 = scmp.eq.s32.totalorder %s19, 3
      %p153 = por %p151, %p152
      %p154 = scmp.ne.s32.totalorder %s146, %s149
      %p155 = scmp.eq.s32.totalorder %s19, 0
      %p156 = por %p154, %p155
      %p157 = scmp.ne.s32.totalorder %s146, %s149
      %p158 = scmp.eq.s32.totalorder %s24, 3
      %p159 = por %p157, %p158
      %p160 = scmp.ne.s32.totalorder %s149, %s150
      %p161 = scmp.eq.s32.totalorder %s24, 0
      %p162 = por %p160, %p161
      %p163 = scmp.ne.s32.totalorder %s149, %s150
      %p164 = scmp.eq.s32.totalorder %s25, 3
      %p165 = por %p163, %p164
      %p167 = scmp.ne.s32.totalorder %s150, %s166
      %p168 = scmp.eq.s32.totalorder %s25, 0
      %p169 = por %p167, %p168
      %p170 = scmp.le.s32.totalorder 1, %s19
      %p171 = scmp.lt.s32.totalorder %s19, 5
      %p172 = pnand %p170, %p171
      %p173 = pneg %p172
      // Predicated region
      $region9: #{tpu_custom_call.1} parent=5 // pred_check
        _
      $region10: #{tpu_custom_call.1} parent=5 // pred_check_branch
        %175 = sbr.rel (%p172) target = $region12
      $region11: #{tpu_custom_call.1} parent=5 // pred_region
        %s176 = ssub.s32 %s19, 1
        // Predicated region
        $region13: #{tpu_custom_call.1} parent=11 // pred_check
          %p177 = pneg %p113
        $region14: #{tpu_custom_call.1} parent=11 // pred_check_branch
          %179 = sbr.rel (%p177) target = $region16
        $region15: #{tpu_custom_call.1} parent=11 // pred_region
          _
        $region16: #{tpu_custom_call.1} parent=11 // pred_fallthru
          _
        // Predicated region
        $region17: #{tpu_custom_call.1} parent=11 // pred_check
          %p180 = pneg %p134
        $region18: #{tpu_custom_call.1} parent=11 // pred_check_branch
          %182 = sbr.rel (%p180) target = $region20
        $region19: #{tpu_custom_call.1} parent=11 // pred_region
          _
        $region20: #{tpu_custom_call.1} parent=11 // pred_fallthru
          _
      $region12: #{tpu_custom_call.1} parent=5 // pred_fallthru
        _
      %p183 = scmp.lt.s32.totalorder %s19, 4
      // Predicated region
      $region21: #{tpu_custom_call.1} parent=5 // pred_check
        %p184 = pneg %p183
      $region22: #{tpu_custom_call.1} parent=5 // pred_check_branch
        %186 = sbr.rel (%p184) target = $region24
      $region23: #{tpu_custom_call.1} parent=5 // pred_region
        // Predicated region
        $region25: #{tpu_custom_call.1} parent=23 // pred_check
          %p187 = pneg %p60
        $region26: #{tpu_custom_call.1} parent=23 // pred_check_branch
          %189 = sbr.rel (%p187) target = $region28
        $region27: #{tpu_custom_call.1} parent=23 // pred_region
          %s190 = sand.u32 %s50, 1
          %s191 = scalar_lea.sflag [#allocation5], %s190
          %s192 = sand.u32 %s50, 1
          %s193 = smul.addr %s192, 32
          %s194 = scalar_lea.vmem [#allocation4], %s193
          %s195 = smul.u32 4, %s28
          %s197 = ssub.s32 512, 512
          %198 = vsyncadd %s191, %s197
          %s199 = smul.addr %s26, 8
          %s200 = sadd.s32 %s195, %s199
          %s201 = smul.addr %s200, 128
          %s202 = scalar_lea.hbm %s0, %s201
          %s204 = sshll.u32 %s194, 4
          %s205 = int_to_ptr.vmem [resolvable:$true] %s204
          %207 = dma.hbm_to_vmem [thread:$0]  %s202, 512, %s205, %s191
        $region28: #{tpu_custom_call.1} parent=23 // pred_fallthru
          _
        // Predicated region
        $region29: #{tpu_custom_call.1} parent=23 // pred_check
          %p208 = pneg %p86
        $region30: #{tpu_custom_call.1} parent=23 // pred_check_branch
          %210 = sbr.rel (%p208) target = $region32
        $region31: #{tpu_custom_call.1} parent=23 // pred_region
          %s211 = sand.u32 %s76, 1
          %s212 = scalar_lea.sflag [#allocation8], %s211
          %s213 = sand.u32 %s76, 1
          %s214 = smul.addr %s213, 512
          %s215 = scalar_lea.vmem [#allocation7], %s214
          %s216 = smul.u32 64, %s28
          %s218 = ssub.s32 8192, 8192
          %219 = vsyncadd %s212, %s218
          %s220 = smul.addr %s216, 128
          %s221 = scalar_lea.hbm %s1, %s220
          %s222 = sshll.u32 %s215, 4
          %s223 = int_to_ptr.vmem [resolvable:$true] %s222
          %228 = dma.hbm_to_vmem [thread:$0]  %s221, 8192, %s223, %s212, 128, 128, 8
        $region32: #{tpu_custom_call.1} parent=23 // pred_fallthru
          _
      $region24: #{tpu_custom_call.1} parent=5 // pred_fallthru
        _
      %p229 = scmp.le.s32.totalorder 1, %s19
      %p230 = scmp.lt.s32.totalorder %s19, 5
      %p231 = pnand %p229, %p230
      %p232 = pneg %p231
      // Predicated region
      $region33: #{tpu_custom_call.1} parent=5 // pred_check
        _
      $region34: #{tpu_custom_call.1} parent=5 // pred_check_branch
        %234 = sbr.rel (%p231) target = $region36
      $region35: #{tpu_custom_call.1} parent=5 // pred_region
        %s235 = ssub.s32 %s19, 1
        %s236 = sand.u32 %s53, 1
        %s237 = scalar_lea.sflag [#allocation5], %s236
        %s238 = sand.u32 %s53, 1
        %s239 = smul.addr %s238, 32
        %s240 = scalar_lea.vmem [#allocation4], %s239
        // Predicated region
        $region37: #{tpu_custom_call.1} parent=35 // pred_check
          %p241 = pneg %p66
        $region38: #{tpu_custom_call.1} parent=35 // pred_check_branch
          %243 = sbr.rel (%p241) target = $region40
        $region39: #{tpu_custom_call.1} parent=35 // pred_region
          %244 = dma.done %s237, 512
        $region40: #{tpu_custom_call.1} parent=35 // pred_fallthru
          _
        %s245 = sand.u32 %s79, 1
        %s246 = scalar_lea.sflag [#allocation8], %s245
        %s247 = sand.u32 %s79, 1
        %s248 = smul.addr %s247, 512
        %s249 = scalar_lea.vmem [#allocation7], %s248
        // Predicated region
        $region41: #{tpu_custom_call.1} parent=35 // pred_check
          %p250 = pneg %p92
        $region42: #{tpu_custom_call.1} parent=35 // pred_check_branch
          %252 = sbr.rel (%p250) target = $region44
        $region43: #{tpu_custom_call.1} parent=35 // pred_region
          %253 = dma.done %s246, 8192
        $region44: #{tpu_custom_call.1} parent=35 // pred_fallthru
          _
        %s254 = sand.u32 %s53, 1
        %s255 = scalar_lea.sflag [#allocation5], %s254
        %s256 = sand.u32 %s53, 1
        %s257 = smul.addr %s256, 32
        %s258 = scalar_lea.vmem [#allocation4], %s257
        %p259 = pneg %p66
        %p260 = pneg %p63
        %s261 = sand.u32 %s79, 1
        %s262 = scalar_lea.sflag [#allocation8], %s261
        %s263 = sand.u32 %s79, 1
        %s264 = smul.addr %s263, 512
        %s265 = scalar_lea.vmem [#allocation7], %s264
        %p266 = pneg %p92
        %p267 = pneg %p89
        %p268 = pneg %p113
        %p269 = pneg %p110
        %p270 = pneg %p134
        %p271 = pneg %p131
        %p272 = pneg %p162
        %p273 = pneg %p159
        %s274 = sand.u32 %s149, 1
        %s275 = scalar_lea.sflag [#allocation6], %s274
        %s276 = sand.u32 %s149, 1
        %s277 = smul.addr %s276, 32
        %s278 = scalar_lea.vmem [#allocation9], %s277
        %s279 = smul.u32 4, %s31
        %s280 = smul.u32 64, %s31
        %s281 = smul.u32 4, %s31
        %p282 = scmp.eq.s32.totalorder %s30, 0
        %p283 = scmp.eq.s32.totalorder %s31, 0
        %p284 = pnand %p282, %p283
        %p285 = pneg %p284
        // Predicated region
        $region45: #{tpu_custom_call.1} parent=35 // pred_check
          _
        $region46: #{tpu_custom_call.1} parent=35 // pred_check_branch
          %287 = sbr.rel (%p284) target = $region48
        $region47: #{tpu_custom_call.1} parent=35 // pred_region
          %288 = vst [vmem:[#allocation2] sm:$0xff] 0.0
        $region48: #{tpu_custom_call.1} parent=35 // pred_fallthru
          _
        // Predicated region
        $region49: #{tpu_custom_call.1} parent=35 // pred_check
          %p289 = pneg %p282
        $region50: #{tpu_custom_call.1} parent=35 // pred_check_branch
          %291 = sbr.rel (%p289) target = $region52
        $region51: #{tpu_custom_call.1} parent=35 // pred_region
          %v292 = vld [vmem:[#allocation2] sm:$0xff]
          %v293 = vld [vmem:[%s240] sm:$0xff]
          %v294 = vld [vmem:[%s240 + $0x8] sm:$0xff]
          %v295 = vld [vmem:[%s240 + $0x10] sm:$0xff]
          %v296 = vld [vmem:[%s240 + $0x18] sm:$0xff]
          %v297 = vld [vmem:[%s249] sm:$0xff]
          %v298 = vld [vmem:[%s249 + $0x8] sm:$0xff]
          %v299 = vld [vmem:[%s249 + $0x10] sm:$0xff]
          %v300 = vld [vmem:[%s249 + $0x18] sm:$0xff]
          %v301 = vld [vmem:[%s249 + $0x20] sm:$0xff]
          %v302 = vld [vmem:[%s249 + $0x28] sm:$0xff]
          %v303 = vld [vmem:[%s249 + $0x30] sm:$0xff]
          %v304 = vld [vmem:[%s249 + $0x38] sm:$0xff]
          %v305 = vld [vmem:[%s249 + $0x40] sm:$0xff]
          %v306 = vld [vmem:[%s249 + $0x48] sm:$0xff]
          %v307 = vld [vmem:[%s249 + $0x50] sm:$0xff]
          %v308 = vld [vmem:[%s249 + $0x58] sm:$0xff]
          %v309 = vld [vmem:[%s249 + $0x60] sm:$0xff]
          %v310 = vld [vmem:[%s249 + $0x68] sm:$0xff]
          %v311 = vld [vmem:[%s249 + $0x70] sm:$0xff]
          %v312 = vld [vmem:[%s249 + $0x78] sm:$0xff]
          %v313 = vld [vmem:[%s249 + $0x80] sm:$0xff]
          %v314 = vld [vmem:[%s249 + $0x88] sm:$0xff]
          %v315 = vld [vmem:[%s249 + $0x90] sm:$0xff]
          %v316 = vld [vmem:[%s249 + $0x98] sm:$0xff]
          %v317 = vld [vmem:[%s249 + $0xa0] sm:$0xff]
          %v318 = vld [vmem:[%s249 + $0xa8] sm:$0xff]
          %v319 = vld [vmem:[%s249 + $0xb0] sm:$0xff]
          %v320 = vld [vmem:[%s249 + $0xb8] sm:$0xff]
          %v321 = vld [vmem:[%s249 + $0xc0] sm:$0xff]
          %v322 = vld [vmem:[%s249 + $0xc8] sm:$0xff]
          %v323 = vld [vmem:[%s249 + $0xd0] sm:$0xff]
          %v324 = vld [vmem:[%s249 + $0xd8] sm:$0xff]
          %v325 = vld [vmem:[%s249 + $0xe0] sm:$0xff]
          %v326 = vld [vmem:[%s249 + $0xe8] sm:$0xff]
          %v327 = vld [vmem:[%s249 + $0xf0] sm:$0xff]
          %v328 = vld [vmem:[%s249 + $0xf8] sm:$0xff]
          %v329 = vld [vmem:[%s249 + $0x100] sm:$0xff]
          %v330 = vld [vmem:[%s249 + $0x108] sm:$0xff]
          %v331 = vld [vmem:[%s249 + $0x110] sm:$0xff]
          %v332 = vld [vmem:[%s249 + $0x118] sm:$0xff]
          %v333 = vld [vmem:[%s249 + $0x120] sm:$0xff]
          %v334 = vld [vmem:[%s249 + $0x128] sm:$0xff]
          %v335 = vld [vmem:[%s249 + $0x130] sm:$0xff]
          %v336 = vld [vmem:[%s249 + $0x138] sm:$0xff]
          %v337 = vld [vmem:[%s249 + $0x140] sm:$0xff]
          %v338 = vld [vmem:[%s249 + $0x148] sm:$0xff]
          %v339 = vld [vmem:[%s249 + $0x150] sm:$0xff]
          %v340 = vld [vmem:[%s249 + $0x158] sm:$0xff]
          %v341 = vld [vmem:[%s249 + $0x160] sm:$0xff]
          %v342 = vld [vmem:[%s249 + $0x168] sm:$0xff]
          %v343 = vld [vmem:[%s249 + $0x170] sm:$0xff]
          %v344 = vld [vmem:[%s249 + $0x178] sm:$0xff]
          %v345 = vld [vmem:[%s249 + $0x180] sm:$0xff]
          %v346 = vld [vmem:[%s249 + $0x188] sm:$0xff]
          %v347 = vld [vmem:[%s249 + $0x190] sm:$0xff]
          %v348 = vld [vmem:[%s249 + $0x198] sm:$0xff]
          %v349 = vld [vmem:[%s249 + $0x1a0] sm:$0xff]
          %v350 = vld [vmem:[%s249 + $0x1a8] sm:$0xff]
          %v351 = vld [vmem:[%s249 + $0x1b0] sm:$0xff]
          %v352 = vld [vmem:[%s249 + $0x1b8] sm:$0xff]
          %v353 = vld [vmem:[%s249 + $0x1c0] sm:$0xff]
          %v354 = vld [vmem:[%s249 + $0x1c8] sm:$0xff]
          %v355 = vld [vmem:[%s249 + $0x1d0] sm:$0xff]
          %v356 = vld [vmem:[%s249 + $0x1d8] sm:$0xff]
          %v357 = vld [vmem:[%s249 + $0x1e0] sm:$0xff]
          %v358 = vld [vmem:[%s249 + $0x1e8] sm:$0xff]
          %v359 = vld [vmem:[%s249 + $0x1f0] sm:$0xff]
          %v360 = vld [vmem:[%s249 + $0x1f8] sm:$0xff]
          %361 = vmatprep.subr.mxu0 0.0
          %362 = vmatpush1.msra.mxu0 %v297
          %363 = vmatprep.subr.mxu0 0.0
          %364 = vmatpush1.msra.mxu0 %v298
          %365 = vmatprep.subr.mxu0 0.0
          %366 = vmatpush1.msra.mxu0 %v299
          %367 = vmatprep.subr.mxu0 0.0
          %368 = vmatpush1.msra.mxu0 %v300
          %369 = vmatprep.subr.mxu0 0.0
          %370 = vmatpush1.msra.mxu0 %v301
          %371 = vmatprep.subr.mxu0 0.0
          %372 = vmatpush1.msra.mxu0 %v302
          %373 = vmatprep.subr.mxu0 0.0
          %374 = vmatpush1.msra.mxu0 %v303
          %375 = vmatprep.subr.mxu0 0.0
          %376 = vmatpush1.msra.mxu0 %v304
          %377 = vmatprep.subr.mxu0 0.0
          %378 = vmatpush1.msra.mxu0 %v305
          %379 = vmatprep.subr.mxu0 0.0
          %380 = vmatpush1.msra.mxu0 %v306
          %381 = vmatprep.subr.mxu0 0.0
          %382 = vmatpush1.msra.mxu0 %v307
          %383 = vmatprep.subr.mxu0 0.0
          %384 = vmatpush1.msra.mxu0 %v308
          %385 = vmatprep.subr.mxu0 0.0
          %386 = vmatpush1.msra.mxu0 %v309
          %387 = vmatprep.subr.mxu0 0.0
          %388 = vmatpush1.msra.mxu0 %v310
          %389 = vmatprep.subr.mxu0 0.0
          %390 = vmatpush1.msra.mxu0 %v311
          %391 = vmatprep.subr.mxu0 0.0
          %392 = vmatpush1.msra.mxu0 %v312
          %393 = vmatprep.subr.mxu0 0.0
          %394 = vmatpush1.msra.mxu0 %v313
          %395 = vmatprep.subr.mxu0 0.0
          %396 = vmatpush1.msra.mxu0 %v314
          %397 = vmatprep.subr.mxu0 0.0
          %398 = vmatpush1.msra.mxu0 %v315
          %399 = vmatprep.subr.mxu0 0.0
          %400 = vmatpush1.msra.mxu0 %v316
          %401 = vmatprep.subr.mxu0 0.0
          %402 = vmatpush1.msra.mxu0 %v317
          %403 = vmatprep.subr.mxu0 0.0
          %404 = vmatpush1.msra.mxu0 %v318
          %405 = vmatprep.subr.mxu0 0.0
          %406 = vmatpush1.msra.mxu0 %v319
          %407 = vmatprep.subr.mxu0 0.0
          %408 = vmatpush1.msra.mxu0 %v320
          %409 = vmatprep.subr.mxu0 0.0
          %410 = vmatpush1.msra.mxu0 %v321
          %411 = vmatprep.subr.mxu0 0.0
          %412 = vmatpush1.msra.mxu0 %v322
          %413 = vmatprep.subr.mxu0 0.0
          %414 = vmatpush1.msra.mxu0 %v323
          %415 = vmatprep.subr.mxu0 0.0
          %416 = vmatpush1.msra.mxu0 %v324
          %417 = vmatprep.subr.mxu0 0.0
          %418 = vmatpush1.msra.mxu0 %v325
          %419 = vmatprep.subr.mxu0 0.0
          %420 = vmatpush1.msra.mxu0 %v326
          %421 = vmatprep.subr.mxu0 0.0
          %422 = vmatpush1.msra.mxu0 %v327
          %423 = vmatprep.subr.mxu0 0.0
          %424 = vmatpush1.msra.mxu0 %v328
          %425 = vmatprep.mubr.f32.mxu0 %v294
          %426 = vmatmul.mubr.f32.gmra.mrb[0].mxu0 %v293
          %v427 = vpop.f32.mrb[0].mxu0
          %v428 = vadd.f32 0.0, %v427
          %v429 = vpop.f32.mrb[0].mxu0
          %430 = vdwg.mxu0
          %431 = vmatprep.subr.mxu0 0.0
          %432 = vmatpush1.msra.mxu0 %v329
          %433 = vmatprep.subr.mxu0 0.0
          %434 = vmatpush1.msra.mxu0 %v330
          %435 = vmatprep.subr.mxu0 0.0
          %436 = vmatpush1.msra.mxu0 %v331
          %437 = vmatprep.subr.mxu0 0.0
          %438 = vmatpush1.msra.mxu0 %v332
          %439 = vmatprep.subr.mxu0 0.0
          %440 = vmatpush1.msra.mxu0 %v333
          %441 = vmatprep.subr.mxu0 0.0
          %442 = vmatpush1.msra.mxu0 %v334
          %443 = vmatprep.subr.mxu0 0.0
          %444 = vmatpush1.msra.mxu0 %v335
          %445 = vmatprep.subr.mxu0 0.0
          %446 = vmatpush1.msra.mxu0 %v336
          %447 = vmatprep.subr.mxu0 0.0
          %448 = vmatpush1.msra.mxu0 %v337
          %449 = vmatprep.subr.mxu0 0.0
          %450 = vmatpush1.msra.mxu0 %v338
          %451 = vmatprep.subr.mxu0 0.0
          %452 = vmatpush1.msra.mxu0 %v339
          %453 = vmatprep.subr.mxu0 0.0
          %454 = vmatpush1.msra.mxu0 %v340
          %455 = vmatprep.subr.mxu0 0.0
          %456 = vmatpush1.msra.mxu0 %v341
          %457 = vmatprep.subr.mxu0 0.0
          %458 = vmatpush1.msra.mxu0 %v342
          %459 = vmatprep.subr.mxu0 0.0
          %460 = vmatpush1.msra.mxu0 %v343
          %461 = vmatprep.subr.mxu0 0.0
          %462 = vmatpush1.msra.mxu0 %v344
          %463 = vmatprep.subr.mxu0 0.0
          %464 = vmatpush1.msra.mxu0 %v345
          %465 = vmatprep.subr.mxu0 0.0
          %466 = vmatpush1.msra.mxu0 %v346
          %467 = vmatprep.subr.mxu0 0.0
          %468 = vmatpush1.msra.mxu0 %v347
          %469 = vmatprep.subr.mxu0 0.0
          %470 = vmatpush1.msra.mxu0 %v348
          %471 = vmatprep.subr.mxu0 0.0
          %472 = vmatpush1.msra.mxu0 %v349
          %473 = vmatprep.subr.mxu0 0.0
          %474 = vmatpush1.msra.mxu0 %v350
          %475 = vmatprep.subr.mxu0 0.0
          %476 = vmatpush1.msra.mxu0 %v351
          %477 = vmatprep.subr.mxu0 0.0
          %478 = vmatpush1.msra.mxu0 %v352
          %479 = vmatprep.subr.mxu0 0.0
          %480 = vmatpush1.msra.mxu0 %v353
          %481 = vmatprep.subr.mxu0 0.0
          %482 = vmatpush1.msra.mxu0 %v354
          %483 = vmatprep.subr.mxu0 0.0
          %484 = vmatpush1.msra.mxu0 %v355
          %485 = vmatprep.subr.mxu0 0.0
          %486 = vmatpush1.msra.mxu0 %v356
          %487 = vmatprep.subr.mxu0 0.0
          %488 = vmatpush1.msra.mxu0 %v357
          %489 = vmatprep.subr.mxu0 0.0
          %490 = vmatpush1.msra.mxu0 %v358
          %491 = vmatprep.subr.mxu0 0.0
          %492 = vmatpush1.msra.mxu0 %v359
          %493 = vmatprep.subr.mxu0 0.0
          %494 = vmatpush1.msra.mxu0 %v360
          %495 = vmatprep.mubr.f32.mxu0 %v296
          %496 = vmatmul.mubr.f32.gmra.mrb[0].mxu0 %v295
          %v497 = vpop.f32.mrb[0].mxu0
          %v498 = vadd.f32 %v428, %v497
          %v499 = vpop.f32.mrb[0].mxu0
          %500 = vdwg.mxu0
          %v501 = vadd.f32 %v292, %v498
          %502 = vst [vmem:[#allocation2] sm:$0xff] %v501
          %503 = vst [vmem:[%s278] sm:$0xff] 0.0
          %504 = vst [vmem:[%s278 + $0x8] sm:$0xff] 0.0
          %505 = vst [vmem:[%s278 + $0x10] sm:$0xff] 0.0
          %506 = vst [vmem:[%s278 + $0x18] sm:$0xff] 0.0
        $region52: #{tpu_custom_call.1} parent=35 // pred_fallthru
          _
        %p507 = scmp.eq.s32.totalorder %s31, 1
        %p508 = pnand %p282, %p507
        %p509 = pneg %p508
        // Predicated region
        $region53: #{tpu_custom_call.1} parent=35 // pred_check
          _
        $region54: #{tpu_custom_call.1} parent=35 // pred_check_branch
          %511 = sbr.rel (%p508) target = $region56
        $region55: #{tpu_custom_call.1} parent=35 // pred_region
          %v512 = vld [vmem:[#allocation2] sm:$0xff]
          %v513 = vld [vmem:[%s2] sm:$0x1]
          %v515 = vlaneseq
          %v516 = vshrl.u32 %v515, 7
          %v517 = vsub.s32 0, %v516
          %v518 = vrot.slane %v513, %v517
          %v520 = vadd.f32 %v512, %v518
          %v521 = vtanh.pop %v520
          %v522 = vmul.f32 %v521, %v521
          %v523 = vsub.f32 1.0, %v522
          %v524 = vld [vmem:[%s3] sm:$0x1]
          %v526 = vlaneseq
          %v527 = vshrl.u32 %v526, 7
          %v528 = vsub.s32 0, %v527
          %v529 = vrot.slane %v524, %v528
          %v531 = vmul.f32 %v523, %v529
          %532 = vst [vmem:[#allocation3] sm:$0xff] %v531
        $region56: #{tpu_custom_call.1} parent=35 // pred_fallthru
          _
        %p533 = scmp.eq.s32.totalorder %s30, 1
        // Predicated region
        $region57: #{tpu_custom_call.1} parent=35 // pred_check
          %p534 = pneg %p533
        $region58: #{tpu_custom_call.1} parent=35 // pred_check_branch
          %536 = sbr.rel (%p534) target = $region60
        $region59: #{tpu_custom_call.1} parent=35 // pred_region
          %v537 = vld [vmem:[#allocation3] sm:$0xff]
          %v538 = vld [vmem:[%s249] sm:$0xff]
          %v539 = vld [vmem:[%s249 + $0x8] sm:$0xff]
          %v540 = vld [vmem:[%s249 + $0x10] sm:$0xff]
          %v541 = vld [vmem:[%s249 + $0x18] sm:$0xff]
          %v542 = vld [vmem:[%s249 + $0x20] sm:$0xff]
          %v543 = vld [vmem:[%s249 + $0x28] sm:$0xff]
          %v544 = vld [vmem:[%s249 + $0x30] sm:$0xff]
          %v545 = vld [vmem:[%s249 + $0x38] sm:$0xff]
          %v546 = vld [vmem:[%s249 + $0x40] sm:$0xff]
          %v547 = vld [vmem:[%s249 + $0x48] sm:$0xff]
          %v548 = vld [vmem:[%s249 + $0x50] sm:$0xff]
          %v549 = vld [vmem:[%s249 + $0x58] sm:$0xff]
          %v550 = vld [vmem:[%s249 + $0x60] sm:$0xff]
          %v551 = vld [vmem:[%s249 + $0x68] sm:$0xff]
          %v552 = vld [vmem:[%s249 + $0x70] sm:$0xff]
          %v553 = vld [vmem:[%s249 + $0x78] sm:$0xff]
          %v554 = vld [vmem:[%s249 + $0x80] sm:$0xff]
          %v555 = vld [vmem:[%s249 + $0x88] sm:$0xff]
          %v556 = vld [vmem:[%s249 + $0x90] sm:$0xff]
          %v557 = vld [vmem:[%s249 + $0x98] sm:$0xff]
          %v558 = vld [vmem:[%s249 + $0xa0] sm:$0xff]
          %v559 = vld [vmem:[%s249 + $0xa8] sm:$0xff]
          %v560 = vld [vmem:[%s249 + $0xb0] sm:$0xff]
          %v561 = vld [vmem:[%s249 + $0xb8] sm:$0xff]
          %v562 = vld [vmem:[%s249 + $0xc0] sm:$0xff]
          %v563 = vld [vmem:[%s249 + $0xc8] sm:$0xff]
          %v564 = vld [vmem:[%s249 + $0xd0] sm:$0xff]
          %v565 = vld [vmem:[%s249 + $0xd8] sm:$0xff]
          %v566 = vld [vmem:[%s249 + $0xe0] sm:$0xff]
          %v567 = vld [vmem:[%s249 + $0xe8] sm:$0xff]
          %v568 = vld [vmem:[%s249 + $0xf0] sm:$0xff]
          %v569 = vld [vmem:[%s249 + $0xf8] sm:$0xff]
          %v570 = vld [vmem:[%s249 + $0x100] sm:$0xff]
          %v571 = vld [vmem:[%s249 + $0x108] sm:$0xff]
          %v572 = vld [vmem:[%s249 + $0x110] sm:$0xff]
          %v573 = vld [vmem:[%s249 + $0x118] sm:$0xff]
          %v574 = vld [vmem:[%s249 + $0x120] sm:$0xff]
          %v575 = vld [vmem:[%s249 + $0x128] sm:$0xff]
          %v576 = vld [vmem:[%s249 + $0x130] sm:$0xff]
          %v577 = vld [vmem:[%s249 + $0x138] sm:$0xff]
          %v578 = vld [vmem:[%s249 + $0x140] sm:$0xff]
          %v579 = vld [vmem:[%s249 + $0x148] sm:$0xff]
          %v580 = vld [vmem:[%s249 + $0x150] sm:$0xff]
          %v581 = vld [vmem:[%s249 + $0x158] sm:$0xff]
          %v582 = vld [vmem:[%s249 + $0x160] sm:$0xff]
          %v583 = vld [vmem:[%s249 + $0x168] sm:$0xff]
          %v584 = vld [vmem:[%s249 + $0x170] sm:$0xff]
          %v585 = vld [vmem:[%s249 + $0x178] sm:$0xff]
          %v586 = vld [vmem:[%s249 + $0x180] sm:$0xff]
          %v587 = vld [vmem:[%s249 + $0x188] sm:$0xff]
          %v588 = vld [vmem:[%s249 + $0x190] sm:$0xff]
          %v589 = vld [vmem:[%s249 + $0x198] sm:$0xff]
          %v590 = vld [vmem:[%s249 + $0x1a0] sm:$0xff]
          %v591 = vld [vmem:[%s249 + $0x1a8] sm:$0xff]
          %v592 = vld [vmem:[%s249 + $0x1b0] sm:$0xff]
          %v593 = vld [vmem:[%s249 + $0x1b8] sm:$0xff]
          %v594 = vld [vmem:[%s249 + $0x1c0] sm:$0xff]
          %v595 = vld [vmem:[%s249 + $0x1c8] sm:$0xff]
          %v596 = vld [vmem:[%s249 + $0x1d0] sm:$0xff]
          %v597 = vld [vmem:[%s249 + $0x1d8] sm:$0xff]
          %v598 = vld [vmem:[%s249 + $0x1e0] sm:$0xff]
          %v599 = vld [vmem:[%s249 + $0x1e8] sm:$0xff]
          %v600 = vld [vmem:[%s249 + $0x1f0] sm:$0xff]
          %v601 = vld [vmem:[%s249 + $0x1f8] sm:$0xff]
          %602 = vmatprep.subr.mxu0 0.0
          %603 = vmatpush1.xpose.msra.mxu0 %v538
          %604 = vmatprep.subr.mxu0 0.0
          %605 = vmatpush1.xpose.msra.mxu0 %v539
          %606 = vmatprep.subr.mxu0 0.0
          %607 = vmatpush1.xpose.msra.mxu0 %v540
          %608 = vmatprep.subr.mxu0 0.0
          %609 = vmatpush1.xpose.msra.mxu0 %v541
          %610 = vmatprep.subr.mxu0 0.0
          %611 = vmatpush1.xpose.msra.mxu0 %v542
          %612 = vmatprep.subr.mxu0 0.0
          %613 = vmatpush1.xpose.msra.mxu0 %v543
          %614 = vmatprep.subr.mxu0 0.0
          %615 = vmatpush1.xpose.msra.mxu0 %v544
          %616 = vmatprep.subr.mxu0 0.0
          %617 = vmatpush1.xpose.msra.mxu0 %v545
          %618 = vmatprep.subr.mxu0 0.0
          %619 = vmatpush1.xpose.msra.mxu0 %v546
          %620 = vmatprep.subr.mxu0 0.0
          %621 = vmatpush1.xpose.msra.mxu0 %v547
          %622 = vmatprep.subr.mxu0 0.0
          %623 = vmatpush1.xpose.msra.mxu0 %v548
          %624 = vmatprep.subr.mxu0 0.0
          %625 = vmatpush1.xpose.msra.mxu0 %v549
          %626 = vmatprep.subr.mxu0 0.0
          %627 = vmatpush1.xpose.msra.mxu0 %v550
          %628 = vmatprep.subr.mxu0 0.0
          %629 = vmatpush1.xpose.msra.mxu0 %v551
          %630 = vmatprep.subr.mxu0 0.0
          %631 = vmatpush1.xpose.msra.mxu0 %v552
          %632 = vmatprep.subr.mxu0 0.0
          %633 = vmatpush1.xpose.msra.mxu0 %v553
          %634 = vmatprep.subr.mxu0 0.0
          %635 = vmatpush1.xpose.msra.mxu0 %v554
          %636 = vmatprep.subr.mxu0 0.0
          %637 = vmatpush1.xpose.msra.mxu0 %v555
          %638 = vmatprep.subr.mxu0 0.0
          %639 = vmatpush1.xpose.msra.mxu0 %v556
          %640 = vmatprep.subr.mxu0 0.0
          %641 = vmatpush1.xpose.msra.mxu0 %v557
          %642 = vmatprep.subr.mxu0 0.0
          %643 = vmatpush1.xpose.msra.mxu0 %v558
          %644 = vmatprep.subr.mxu0 0.0
          %645 = vmatpush1.xpose.msra.mxu0 %v559
          %646 = vmatprep.subr.mxu0 0.0
          %647 = vmatpush1.xpose.msra.mxu0 %v560
          %648 = vmatprep.subr.mxu0 0.0
          %649 = vmatpush1.xpose.msra.mxu0 %v561
          %650 = vmatprep.subr.mxu0 0.0
          %651 = vmatpush1.xpose.msra.mxu0 %v562
          %652 = vmatprep.subr.mxu0 0.0
          %653 = vmatpush1.xpose.msra.mxu0 %v563
          %654 = vmatprep.subr.mxu0 0.0
          %655 = vmatpush1.xpose.msra.mxu0 %v564
          %656 = vmatprep.subr.mxu0 0.0
          %657 = vmatpush1.xpose.msra.mxu0 %v565
          %658 = vmatprep.subr.mxu0 0.0
          %659 = vmatpush1.xpose.msra.mxu0 %v566
          %660 = vmatprep.subr.mxu0 0.0
          %661 = vmatpush1.xpose.msra.mxu0 %v567
          %662 = vmatprep.subr.mxu0 0.0
          %663 = vmatpush1.xpose.msra.mxu0 %v568
          %664 = vmatprep.subr.mxu0 0.0
          %665 = vmatpush1.xpose.msra.mxu0 %v569
          %666 = vmatprep.mubr.f32.mxu0 0.0
          %667 = vmatmul.mubr.f32.gmra.mrb[0].mxu0 %v537
          %v668 = vpop.f32.mrb[0].mxu0
          %v669 = vadd.f32 0.0, %v668
          %v670 = vpop.f32.mrb[0].mxu0
          %v671 = vadd.f32 0.0, %v670
          %672 = vdwg.mxu0
          %673 = vmatprep.subr.mxu0 0.0
          %674 = vmatpush1.xpose.msra.mxu0 %v570
          %675 = vmatprep.subr.mxu0 0.0
          %676 = vmatpush1.xpose.msra.mxu0 %v571
          %677 = vmatprep.subr.mxu0 0.0
          %678 = vmatpush1.xpose.msra.mxu0 %v572
          %679 = vmatprep.subr.mxu0 0.0
          %680 = vmatpush1.xpose.msra.mxu0 %v573
          %681 = vmatprep.subr.mxu0 0.0
          %682 = vmatpush1.xpose.msra.mxu0 %v574
          %683 = vmatprep.subr.mxu0 0.0
          %684 = vmatpush1.xpose.msra.mxu0 %v575
          %685 = vmatprep.subr.mxu0 0.0
          %686 = vmatpush1.xpose.msra.mxu0 %v576
          %687 = vmatprep.subr.mxu0 0.0
          %688 = vmatpush1.xpose.msra.mxu0 %v577
          %689 = vmatprep.subr.mxu0 0.0
          %690 = vmatpush1.xpose.msra.mxu0 %v578
          %691 = vmatprep.subr.mxu0 0.0
          %692 = vmatpush1.xpose.msra.mxu0 %v579
          %693 = vmatprep.subr.mxu0 0.0
          %694 = vmatpush1.xpose.msra.mxu0 %v580
          %695 = vmatprep.subr.mxu0 0.0
          %696 = vmatpush1.xpose.msra.mxu0 %v581
          %697 = vmatprep.subr.mxu0 0.0
          %698 = vmatpush1.xpose.msra.mxu0 %v582
          %699 = vmatprep.subr.mxu0 0.0
          %700 = vmatpush1.xpose.msra.mxu0 %v583
          %701 = vmatprep.subr.mxu0 0.0
          %702 = vmatpush1.xpose.msra.mxu0 %v584
          %703 = vmatprep.subr.mxu0 0.0
          %704 = vmatpush1.xpose.msra.mxu0 %v585
          %705 = vmatprep.subr.mxu0 0.0
          %706 = vmatpush1.xpose.msra.mxu0 %v586
          %707 = vmatprep.subr.mxu0 0.0
          %708 = vmatpush1.xpose.msra.mxu0 %v587
          %709 = vmatprep.subr.mxu0 0.0
          %710 = vmatpush1.xpose.msra.mxu0 %v588
          %711 = vmatprep.subr.mxu0 0.0
          %712 = vmatpush1.xpose.msra.mxu0 %v589
          %713 = vmatprep.subr.mxu0 0.0
          %714 = vmatpush1.xpose.msra.mxu0 %v590
          %715 = vmatprep.subr.mxu0 0.0
          %716 = vmatpush1.xpose.msra.mxu0 %v591
          %717 = vmatprep.subr.mxu0 0.0
          %718 = vmatpush1.xpose.msra.mxu0 %v592
          %719 = vmatprep.subr.mxu0 0.0
          %720 = vmatpush1.xpose.msra.mxu0 %v593
          %721 = vmatprep.subr.mxu0 0.0
          %722 = vmatpush1.xpose.msra.mxu0 %v594
          %723 = vmatprep.subr.mxu0 0.0
          %724 = vmatpush1.xpose.msra.mxu0 %v595
          %725 = vmatprep.subr.mxu0 0.0
          %726 = vmatpush1.xpose.msra.mxu0 %v596
          %727 = vmatprep.subr.mxu0 0.0
          %728 = vmatpush1.xpose.msra.mxu0 %v597
          %729 = vmatprep.subr.mxu0 0.0
          %730 = vmatpush1.xpose.msra.mxu0 %v598
          %731 = vmatprep.subr.mxu0 0.0
          %732 = vmatpush1.xpose.msra.mxu0 %v599
          %733 = vmatprep.subr.mxu0 0.0
          %734 = vmatpush1.xpose.msra.mxu0 %v600
          %735 = vmatprep.subr.mxu0 0.0
          %736 = vmatpush1.xpose.msra.mxu0 %v601
          %737 = vmatprep.mubr.f32.mxu0 0.0
          %738 = vmatmul.mubr.f32.gmra.mrb[0].mxu0 %v537
          %v739 = vpop.f32.mrb[0].mxu0
          %v740 = vadd.f32 0.0, %v739
          %v741 = vpop.f32.mrb[0].mxu0
          %v742 = vadd.f32 0.0, %v741
          %743 = vdwg.mxu0
          %v744 = vld [vmem:[%s240] sm:$0xff]
          %v745 = vld [vmem:[%s240 + $0x8] sm:$0xff]
          %v746 = vld [vmem:[%s240 + $0x10] sm:$0xff]
          %v747 = vld [vmem:[%s240 + $0x18] sm:$0xff]
          %v748 = vmul.f32 %v744, %v669
          %v749 = vmul.f32 %v745, %v671
          %v750 = vmul.f32 %v746, %v740
          %v751 = vmul.f32 %v747, %v742
          %752 = vst [vmem:[%s278] sm:$0xff] %v748
          %753 = vst [vmem:[%s278 + $0x8] sm:$0xff] %v749
          %754 = vst [vmem:[%s278 + $0x10] sm:$0xff] %v750
          %755 = vst [vmem:[%s278 + $0x18] sm:$0xff] %v751
        $region60: #{tpu_custom_call.1} parent=35 // pred_fallthru
          _
        %s756 = sand.u32 %s149, 1
        %s757 = scalar_lea.sflag [#allocation6], %s756
        %s758 = sand.u32 %s149, 1
        %s759 = smul.addr %s758, 32
        %s760 = scalar_lea.vmem [#allocation9], %s759
        // Predicated region
        $region61: #{tpu_custom_call.1} parent=35 // pred_check
          %p761 = pneg %p159
        $region62: #{tpu_custom_call.1} parent=35 // pred_check_branch
          %763 = sbr.rel (%p761) target = $region64
        $region63: #{tpu_custom_call.1} parent=35 // pred_region
          %s764 = smul.u32 4, %s31
          %s766 = ssub.s32 512, 512
          %767 = vsyncadd %s757, %s766
          %s768 = smul.addr %s29, 8
          %s769 = sadd.s32 %s764, %s768
          %s770 = smul.addr %s769, 128
          %s771 = scalar_lea.hbm %s4, %s770
          %s773 = sshll.u32 %s760, 4
          %s774 = int_to_ptr.vmem [resolvable:$true] %s773
          %776 = dma.vmem_to_hbm [thread:$0]  %s774, 512, %s771, %s757
        $region64: #{tpu_custom_call.1} parent=35 // pred_fallthru
          _
      $region36: #{tpu_custom_call.1} parent=5 // pred_fallthru
        _
      %p777 = scmp.le.s32.totalorder 2, %s19
      // Predicated region
      $region65: #{tpu_custom_call.1} parent=5 // pred_check
        %p778 = pneg %p777
      $region66: #{tpu_custom_call.1} parent=5 // pred_check_branch
        %780 = sbr.rel (%p778) target = $region68
      $region67: #{tpu_custom_call.1} parent=5 // pred_region
        %s781 = ssub.s32 %s19, 2
        // Predicated region
        $region69: #{tpu_custom_call.1} parent=67 // pred_check
          %p782 = pneg %p165
        $region70: #{tpu_custom_call.1} parent=67 // pred_check_branch
          %784 = sbr.rel (%p782) target = $region72
        $region71: #{tpu_custom_call.1} parent=67 // pred_region
          %s785 = sand.u32 %s150, 1
          %s786 = scalar_lea.sflag [#allocation6], %s785
          %s787 = sand.u32 %s150, 1
          %s788 = smul.addr %s787, 32
          %s789 = scalar_lea.vmem [#allocation9], %s788
          %790 = dma.done %s786, 512
        $region72: #{tpu_custom_call.1} parent=67 // pred_fallthru
          _
      $region68: #{tpu_custom_call.1} parent=5 // pred_fallthru
        _
    $region6: #{tpu_custom_call.1} parent=1 // loop_footer
      %s23 = sadd.s32 1, %s19
    $region7: #{tpu_custom_call.1} parent=1 // loop_footer_branch
      %18 = sbr.rel target = $region3
    $region8: #{tpu_custom_call.1} parent=1 // loop_exit
      _
    %791 = vsyncpa [#allocation5], 1
    %s792 = scalar_lea.sflag [#allocation5], 1
    %793 = vsyncpa %s792, 1
    %794 = vsyncpa [#allocation8], 1
    %s795 = scalar_lea.sflag [#allocation8], 1
    %796 = vsyncpa %s795, 1
    %797 = vsyncpa [#allocation6], 1
    %s798 = scalar_lea.sflag [#allocation6], 1
    %799 = vsyncpa %s798, 1

</llo_original>
